<compile_context>
chip_gen: v6e
topology: v6e:2x2x1
jax: 0.10.0
libtpu: 0.0.40
codegen_flags: <defaults>
</compile_context>

<pallas_src>
import functools

import jax
import jax.numpy as jnp
from jax.experimental import pallas as pl
from jax.experimental.pallas import tpu as pltpu


def _round_up(x, m):
    return -(-x // m) * m


# ----------------------------------------------------------------------------
# Pallas kernel: fused multi-layer  h @ W[l] + b[l]  with ReLU between layers
# ----------------------------------------------------------------------------
def _mlp_kernel(x_ref, w_ref, b_ref, out_ref, *, num_layers):
    """x_ref (tm, Dp) bf16; w_ref (L, Dp, Dp) bf16; b_ref (L, 1, Dp) f32."""
    h = x_ref[...]                                         # bf16 (tm, Dp)
    acc = None
    for li in range(num_layers):                           # static unroll
        acc = jnp.dot(h, w_ref[li], preferred_element_type=jnp.float32)
        acc = acc + b_ref[li]                              # f32 bias
        if li < num_layers - 1:
            acc = jnp.maximum(acc, 0.0)                    # ReLU
            h = acc.astype(x_ref.dtype)                    # bf16 for next MXU pass
    out_ref[...] = acc.astype(out_ref.dtype)


# ----------------------------------------------------------------------------
# One-time parameter preparation (pad + cast + stack; static across calls)
# ----------------------------------------------------------------------------
def prepare_mlp_params(params):
    """params: list of (W (in,out) f32, b (out,) f32).

    Returns (w_stack bf16 (L,Dp,Dp), b_stack f32 (L,1,Dp), dim_in, dim_out).
    Every feature dim is zero-padded to a common lane-aligned Dp; zero padding
    is exact (padded lanes contribute 0 to every dot and stay 0 through
    bias(0) + ReLU).
    """
    dims = [params[0][0].shape[0]] + [w.shape[1] for (w, _) in params]
    Dp = _round_up(max(dims), 128)
    w_stack = jnp.stack([
        jnp.pad(w, ((0, Dp - w.shape[0]), (0, Dp - w.shape[1]))).astype(jnp.bfloat16)
        for (w, _) in params])
    b_stack = jnp.stack([
        jnp.pad(b, (0, Dp - b.shape[0])).reshape(1, Dp).astype(jnp.float32)
        for (_, b) in params])
    return w_stack, b_stack, dims[0], dims[-1]


# ----------------------------------------------------------------------------
# Forward wrapper
# ----------------------------------------------------------------------------
@functools.partial(jax.jit, static_argnames=("dim_out", "out_dtype"))
def mlp_forward(x, w_stack, b_stack, *, dim_out, out_dtype=jnp.float32):
    M, K0 = x.shape
    L, Dp, _ = w_stack.shape

    # M-axis tiling: single grid step unless the padded batch is large enough
    # that 512-row tiles amortize the per-step pipeline overhead.
    if M <= 512:
        Mp = _round_up(M, 16)            # bf16 sublane packing
        tm = Mp
    else:
        tm = 512
        Mp = _round_up(M, tm)
    num_tiles = Mp // tm

    x_p = jnp.pad(x, ((0, Mp - M), (0, Dp - K0))).astype(jnp.bfloat16)

    # Constant-index weight/bias blocks: single-buffered when the M axis is
    # tiled (they never change across grid steps); moot when grid=(1,).
    wb_kw = {"pipeline_mode": pl.Buffered(1)} if num_tiles > 1 else {}
    in_specs = [
        pl.BlockSpec((tm, Dp), lambda i: (i, 0)),
        pl.BlockSpec((L, Dp, Dp), lambda i: (0, 0, 0), **wb_kw),
        pl.BlockSpec((L, 1, Dp), lambda i: (0, 0, 0), **wb_kw),
    ]
    out_spec = pl.BlockSpec((tm, Dp), lambda i: (i, 0))

    # Explicit VMEM budget: resident weights/biases + (double-buffered when
    # tiled) x/out tiles, with generous headroom.  Catches configs whose
    # "all weights resident" footprint exceeds v7x's smaller VMEM.
    n_buf = 2 if num_tiles > 1 else 1
    out_itemsize = jnp.dtype(out_dtype).itemsize
    vmem_need = (w_stack.size * 2 + b_stack.size * 4
                 + n_buf * tm * Dp * (2 + out_itemsize))
    vmem_limit = int(min(max(2 * vmem_need + (4 << 20), 16 << 20), 128 << 20))

    out = pl.pallas_call(
        functools.partial(_mlp_kernel, num_layers=L),
        out_shape=jax.ShapeDtypeStruct((Mp, Dp), out_dtype),
        grid_spec=pltpu.PrefetchScalarGridSpec(
            num_scalar_prefetch=0,
            grid=(num_tiles,),
            in_specs=in_specs,
            out_specs=out_spec,
        ),
        compiler_params=pltpu.CompilerParams(
            dimension_semantics=("parallel",),
            vmem_limit_bytes=vmem_limit),
    )(x_p, w_stack, b_stack)
    return out[:M, :dim_out]


# ----------------------------------------------------------------------------
# Parameter init (PyTorch nn.Linear default: U(-1/sqrt(fan_in), 1/sqrt(fan_in)))
# ----------------------------------------------------------------------------
def init_mlp_params(key, dim_in, hidden_dims, dim_out):
    sizes = [dim_in] + list(hidden_dims) + [dim_out]
    params = []
    for kin, kout in zip(sizes[:-1], sizes[1:]):
        key, kw, kb = jax.random.split(key, 3)
        bound = 1.0 / jnp.sqrt(kin)
        w = jax.random.uniform(kw, (kin, kout), jnp.float32, -bound, bound)
        b = jax.random.uniform(kb, (kout,), jnp.float32, -bound, bound)
        params.append((w, b))
    return params


def _reference(x, params):
    ref = x
    for li, (w, b) in enumerate(params):
        ref = ref @ w + b
        if li < len(params) - 1:
            ref = jnp.maximum(ref, 0.0)
    return ref


if __name__ == "__main__":
    dim_in, hidden_dims, dim_out = 16, [32, 20], 8

    key = jax.random.PRNGKey(0)
    kp, kx1, kx2 = jax.random.split(key, 3)
    params = init_mlp_params(kp, dim_in, hidden_dims, dim_out)

    # Pad / cast / stack the parameters ONCE (reused across forward calls).
    w_stack, b_stack, _, d_out = prepare_mlp_params(params)

    # --- small batch: one fused call, grid=(1,) (launch-latency-bound) ------
    x_small = jax.random.normal(kx1, (64, dim_in), jnp.float32)
    out = jax.block_until_ready(
        mlp_forward(x_small, w_stack, b_stack, dim_out=d_out))
    assert out.shape == (64, dim_out), out.shape
    ref = _reference(x_small, params)
    err = float(jnp.max(jnp.abs(out - ref)))
    assert jnp.allclose(out, ref, rtol=5e-2, atol=5e-2), err

    # --- larger batch: 512-row M tiles, single-buffered weight blocks -------
    x_big = jax.random.normal(kx2, (1024 + 7, dim_in), jnp.float32)
    out_big = jax.block_until_ready(
        mlp_forward(x_big, w_stack, b_stack, dim_out=d_out))
    ref_big = _reference(x_big, params)
    assert out_big.shape == ref_big.shape, (out_big.shape, ref_big.shape)
    err_big = float(jnp.max(jnp.abs(out_big - ref_big)))
    assert jnp.allclose(out_big, ref_big, rtol=5e-2, atol=5e-2), err_big

    print("KERNEL_OK")
</pallas_src>

<mosaic_0001>
module attributes {stable_mosaic.version = 11 : i64} {
  func.func @_mlp_kernel(%arg0: i32, %arg1: memref<64x128xbf16, #tpu.memory_space<vmem>>, %arg2: memref<3x128x128xbf16, #tpu.memory_space<vmem>>, %arg3: memref<3x1x128xf32, #tpu.memory_space<vmem>>, %arg4: memref<64x128xf32, #tpu.memory_space<vmem>>) attributes {dimension_semantics = [#tpu.dimension_semantics<parallel>], iteration_bounds = array<i64: 1>, scalar_prefetch = 0 : i64, scratch_operands = 0 : i64, tpu.core_type = #tpu.core_type<tc>, window_params = [{transform_indices = @transform_0, window_bounds = array<i64: 64, 128>}, {pipeline_mode = #tpu.pipeline_mode<synchronous>, transform_indices = @transform_1, window_bounds = array<i64: 3, 128, 128>}, {pipeline_mode = #tpu.pipeline_mode<synchronous>, transform_indices = @transform_2, window_bounds = array<i64: 3, 1, 128>}, {transform_indices = @transform_3, window_bounds = array<i64: 64, 128>}]} {
    %c0 = arith.constant 0 : index
    %c0_0 = arith.constant 0 : index
    %0 = vector.load %arg1[%c0, %c0_0] : memref<64x128xbf16, #tpu.memory_space<vmem>>, vector<64x128xbf16>
    %c0_1 = arith.constant 0 : index
    %c0_2 = arith.constant 0 : index
    %c0_3 = arith.constant 0 : index
    %1 = vector.load %arg2[%c0_1, %c0_2, %c0_3] : memref<3x128x128xbf16, #tpu.memory_space<vmem>>, vector<1x128x128xbf16>
    %2 = vector.shape_cast %1 : vector<1x128x128xbf16> to vector<128x128xbf16>
    %cst = arith.constant dense<0.000000e+00> : vector<64x128xf32>
    %3 = tpu.matmul %0, %2, %cst {dimension_numbers = #tpu.dot_dimension_numbers<[1], [0], [0], [1], [0, 0, 1, 1], [], []>} : vector<64x128xbf16>, vector<128x128xbf16>, vector<64x128xf32> -> vector<64x128xf32>
    %c0_4 = arith.constant 0 : index
    %c0_5 = arith.constant 0 : index
    %c0_6 = arith.constant 0 : index
    %4 = vector.load %arg3[%c0_4, %c0_5, %c0_6] : memref<3x1x128xf32, #tpu.memory_space<vmem>>, vector<1x1x128xf32>
    %5 = vector.shape_cast %4 : vector<1x1x128xf32> to vector<1x128xf32>
    %6 = vector.broadcast %5 : vector<1x128xf32> to vector<64x128xf32>
    %7 = arith.addf %3, %6 : vector<64x128xf32>
    %cst_7 = arith.constant 0.000000e+00 : f32
    %8 = vector.broadcast %cst_7 : f32 to vector<64x128xf32>
    %9 = arith.maximumf %7, %8 : vector<64x128xf32>
    %10 = arith.truncf %9 : vector<64x128xf32> to vector<64x128xbf16>
    %c1 = arith.constant 1 : index
    %c0_8 = arith.constant 0 : index
    %c0_9 = arith.constant 0 : index
    %11 = vector.load %arg2[%c1, %c0_8, %c0_9] : memref<3x128x128xbf16, #tpu.memory_space<vmem>>, vector<1x128x128xbf16>
    %12 = vector.shape_cast %11 : vector<1x128x128xbf16> to vector<128x128xbf16>
    %cst_10 = arith.constant dense<0.000000e+00> : vector<64x128xf32>
    %13 = tpu.matmul %10, %12, %cst_10 {dimension_numbers = #tpu.dot_dimension_numbers<[1], [0], [0], [1], [0, 0, 1, 1], [], []>} : vector<64x128xbf16>, vector<128x128xbf16>, vector<64x128xf32> -> vector<64x128xf32>
    %c1_11 = arith.constant 1 : index
    %c0_12 = arith.constant 0 : index
    %c0_13 = arith.constant 0 : index
    %14 = vector.load %arg3[%c1_11, %c0_12, %c0_13] : memref<3x1x128xf32, #tpu.memory_space<vmem>>, vector<1x1x128xf32>
    %15 = vector.shape_cast %14 : vector<1x1x128xf32> to vector<1x128xf32>
    %16 = vector.broadcast %15 : vector<1x128xf32> to vector<64x128xf32>
    %17 = arith.addf %13, %16 : vector<64x128xf32>
    %cst_14 = arith.constant 0.000000e+00 : f32
    %18 = vector.broadcast %cst_14 : f32 to vector<64x128xf32>
    %19 = arith.maximumf %17, %18 : vector<64x128xf32>
    %20 = arith.truncf %19 : vector<64x128xf32> to vector<64x128xbf16>
    %c2 = arith.constant 2 : index
    %c0_15 = arith.constant 0 : index
    %c0_16 = arith.constant 0 : index
    %21 = vector.load %arg2[%c2, %c0_15, %c0_16] : memref<3x128x128xbf16, #tpu.memory_space<vmem>>, vector<1x128x128xbf16>
    %22 = vector.shape_cast %21 : vector<1x128x128xbf16> to vector<128x128xbf16>
    %cst_17 = arith.constant dense<0.000000e+00> : vector<64x128xf32>
    %23 = tpu.matmul %20, %22, %cst_17 {dimension_numbers = #tpu.dot_dimension_numbers<[1], [0], [0], [1], [0, 0, 1, 1], [], []>} : vector<64x128xbf16>, vector<128x128xbf16>, vector<64x128xf32> -> vector<64x128xf32>
    %c2_18 = arith.constant 2 : index
    %c0_19 = arith.constant 0 : index
    %c0_20 = arith.constant 0 : index
    %24 = vector.load %arg3[%c2_18, %c0_19, %c0_20] : memref<3x1x128xf32, #tpu.memory_space<vmem>>, vector<1x1x128xf32>
    %25 = vector.shape_cast %24 : vector<1x1x128xf32> to vector<1x128xf32>
    %26 = vector.broadcast %25 : vector<1x128xf32> to vector<64x128xf32>
    %27 = arith.addf %23, %26 : vector<64x128xf32>
    %c0_21 = arith.constant 0 : index
    %c0_22 = arith.constant 0 : index
    %28 = vector.load %arg4[%c0_21, %c0_22] : memref<64x128xf32, #tpu.memory_space<vmem>>, vector<64x128xf32>
    tpu.vector_store %arg4[%c0_21, %c0_22], %27 {strides = array<i32>} : memref<64x128xf32, #tpu.memory_space<vmem>>, vector<64x128xf32>,
    return
  }
  func.func @transform_0(%arg0: i32) -> (i32, i32) {
    %c0_i32 = arith.constant 0 : i32
    %c0_i32_0 = arith.constant 0 : i32
    return %arg0, %c0_i32 : i32, i32
  }
  func.func @transform_1(%arg0: i32) -> (i32, i32, i32) {
    %c0_i32 = arith.constant 0 : i32
    %c0_i32_0 = arith.constant 0 : i32
    %c0_i32_1 = arith.constant 0 : i32
    %c0_i32_2 = arith.constant 0 : i32
    return %c0_i32, %c0_i32_0, %c0_i32_1 : i32, i32, i32
  }
  func.func @transform_2(%arg0: i32) -> (i32, i32, i32) {
    %c0_i32 = arith.constant 0 : i32
    %c0_i32_0 = arith.constant 0 : i32
    %c0_i32_1 = arith.constant 0 : i32
    %c0_i32_2 = arith.constant 0 : i32
    return %c0_i32, %c0_i32_0, %c0_i32_1 : i32, i32, i32
  }
  func.func @transform_3(%arg0: i32) -> (i32, i32) {
    %c0_i32 = arith.constant 0 : i32
    %c0_i32_0 = arith.constant 0 : i32
    return %arg0, %c0_i32 : i32, i32
  }
}

</mosaic_0001>

<llo_original>
// kernel: mlp_forward.1
$region0: #{mlp_forward.1}
  #allocation0 [shape = 'u32[]', space=smem, size = 0x4, offset = 0x4, fixed_abs, tag = 'smem constant byte address 0x4 - core index']
  #allocation1 [shape = 'u32[144,128]{1,0:T(1,128)}', space=vmem, size = 0x12000, scoped, tag = 'internal scratch']
  %s0 = inlined_call_operand.vmem [shape: bf16[64,128], index: 0, kind: input, shape index: {}]
  %s1 = inlined_call_operand.hbm [shape: bf16[3,128,128], index: 1, kind: input, shape index: {}]
  %s2 = inlined_call_operand.vmem [shape: f32[3,1,128], index: 2, kind: input, shape index: {}]
  %s3 = inlined_call_operand.vmem [shape: f32[64,128], index: 3, kind: output, shape index: {}]
  %s4 = sld [smem:[#allocation0]]
  $region26: #{mlp_forward.1} parent=0
    _
  %s6 = ssub.s32 1, %s4
  %s7 = scalar_select 0, %s6, %s4
  $region1: #{mlp_forward.1} parent=0
    #allocation2 [shape = 'u8[98304]{0}', space=vmem, size = 0x18000, scoped, tag = 'input window, operand 1, single buffered']
    #allocation3 [shape = 's32[1]{0}', space=sflag, size = 0x4, scoped, tag = 'scoped memory for mlp_forward.1']
    %8 = vsyncpa [#allocation3], 0
    // Predicated region
    $region2: #{mlp_forward.1} parent=1 // pred_check
      _
    $region3: #{mlp_forward.1} parent=1 // pred_check_branch
      %10 = sbr.rel (0) target = $region5
    $region4: #{mlp_forward.1} parent=1 // pred_region
      _
    $region5: #{mlp_forward.1} parent=1 // pred_fallthru
      _
    // Predicated region
    $region6: #{mlp_forward.1} parent=1 // pred_check
      _
    $region7: #{mlp_forward.1} parent=1 // pred_check_branch
      %12 = sbr.rel (0) target = $region9
    $region8: #{mlp_forward.1} parent=1 // pred_region
      %s14 = ssub.s32 3072, 3072
      %15 = vsyncadd [#allocation3], %s14
      %s16 = sshll.u32 [#allocation2], 4
      %s17 = int_to_ptr.vmem [resolvable:$true] %s16
      %22 = dma.hbm_to_vmem [thread:$0]  %s1, 3072, %s17, [#allocation3], 64, 64, 4
    $region9: #{mlp_forward.1} parent=1 // pred_fallthru
      _
    // Predicated region
    $region10: #{mlp_forward.1} parent=1 // pred_check
      _
    $region11: #{mlp_forward.1} parent=1 // pred_check_branch
      %24 = sbr.rel (0) target = $region13
    $region12: #{mlp_forward.1} parent=1 // pred_region
      _
    $region13: #{mlp_forward.1} parent=1 // pred_fallthru
      _
    // Predicated region
    $region14: #{mlp_forward.1} parent=1 // pred_check
      _
    $region15: #{mlp_forward.1} parent=1 // pred_check_branch
      %26 = sbr.rel (0) target = $region17
    $region16: #{mlp_forward.1} parent=1 // pred_region
      %27 = dma.done [#allocation3], 3072
    $region17: #{mlp_forward.1} parent=1 // pred_fallthru
      _
    %v29 = vld [vmem:[%s0] sm:$0xf]
    %v30 = vld [vmem:[%s0 + $0x4] sm:$0xf]
    %v31 = vld [vmem:[%s0 + $0x8] sm:$0xf]
    %v32 = vld [vmem:[%s0 + $0xc] sm:$0xf]
    %v33 = vld [vmem:[%s0 + $0x10] sm:$0xf]
    %v34 = vld [vmem:[%s0 + $0x14] sm:$0xf]
    %v35 = vld [vmem:[%s0 + $0x18] sm:$0xf]
    %v36 = vld [vmem:[%s0 + $0x1c] sm:$0xf]
    %v37 = vld [vmem:[#allocation2] sm:$0xf]
    %v38 = vld [vmem:[#allocation2 + $0x4] sm:$0xf]
    %v39 = vld [vmem:[#allocation2 + $0x8] sm:$0xf]
    %v40 = vld [vmem:[#allocation2 + $0xc] sm:$0xf]
    %v41 = vld [vmem:[#allocation2 + $0x10] sm:$0xf]
    %v42 = vld [vmem:[#allocation2 + $0x14] sm:$0xf]
    %v43 = vld [vmem:[#allocation2 + $0x18] sm:$0xf]
    %v44 = vld [vmem:[#allocation2 + $0x1c] sm:$0xf]
    %v45 = vld [vmem:[#allocation2 + $0x20] sm:$0xf]
    %v46 = vld [vmem:[#allocation2 + $0x24] sm:$0xf]
    %v47 = vld [vmem:[#allocation2 + $0x28] sm:$0xf]
    %v48 = vld [vmem:[#allocation2 + $0x2c] sm:$0xf]
    %v49 = vld [vmem:[#allocation2 + $0x30] sm:$0xf]
    %v50 = vld [vmem:[#allocation2 + $0x34] sm:$0xf]
    %v51 = vld [vmem:[#allocation2 + $0x38] sm:$0xf]
    %v52 = vld [vmem:[#allocation2 + $0x3c] sm:$0xf]
    %v53 = vld [vmem:[%s2] sm:$0x1]
    %v55 = vlaneseq
    %v56 = vshrl.u32 %v55, 7
    %v57 = vsub.s32 0, %v56
    %v58 = vrot.slane %v53, %v57
    %v68 = vunpack.c.l.b16 %v29
    %v69 = vunpack.c.l.b16 %v30
    %v70 = vunpack.c.l.b16 %v31
    %v71 = vunpack.c.l.b16 %v32
    %v72 = vunpack.c.l.b16 %v33
    %v73 = vunpack.c.l.b16 %v34
    %v74 = vunpack.c.l.b16 %v35
    %v75 = vunpack.c.l.b16 %v36
    %v76 = vpack.c.b16 %v69, %v68
    %v77 = vpack.c.b16 %v71, %v70
    %v78 = vpack.c.b16 %v73, %v72
    %v79 = vpack.c.b16 %v75, %v74
    %v100 = vunpack.c.l.b16 %v37
    %v101 = vunpack.c.l.b16 %v38
    %v102 = vunpack.c.l.b16 %v39
    %v103 = vunpack.c.l.b16 %v40
    %v104 = vunpack.c.l.b16 %v41
    %v105 = vunpack.c.l.b16 %v42
    %v106 = vunpack.c.l.b16 %v43
    %v107 = vunpack.c.l.b16 %v44
    %v108 = vunpack.c.l.b16 %v45
    %v109 = vunpack.c.l.b16 %v46
    %v110 = vunpack.c.l.b16 %v47
    %v111 = vunpack.c.l.b16 %v48
    %v112 = vunpack.c.l.b16 %v49
    %v113 = vunpack.c.l.b16 %v50
    %v114 = vunpack.c.l.b16 %v51
    %v115 = vunpack.c.l.b16 %v52
    %v116 = vpack.c.b16 %v101, %v100
    %v117 = vpack.c.b16 %v103, %v102
    %v118 = vpack.c.b16 %v105, %v104
    %v119 = vpack.c.b16 %v107, %v106
    %v120 = vpack.c.b16 %v109, %v108
    %v121 = vpack.c.b16 %v111, %v110
    %v122 = vpack.c.b16 %v113, %v112
    %v123 = vpack.c.b16 %v115, %v114
    %132 = vmatprep.subr.bf16.mxu0 0
    %133 = vmatpush1.bf16.msra.mxu0 %v123
    %134 = vmatprep.subr.bf16.mxu0 0
    %135 = vmatpush1.bf16.msra.mxu0 %v122
    %136 = vmatprep.subr.bf16.mxu0 0
    %137 = vmatpush1.bf16.msra.mxu0 %v121
    %138 = vmatprep.subr.bf16.mxu0 0
    %139 = vmatpush1.bf16.msra.mxu0 %v120
    %140 = vmatprep.subr.bf16.mxu0 0
    %141 = vmatpush1.bf16.msra.mxu0 %v119
    %142 = vmatprep.subr.bf16.mxu0 0
    %143 = vmatpush1.bf16.msra.mxu0 %v118
    %144 = vmatprep.subr.bf16.mxu0 0
    %145 = vmatpush1.bf16.msra.mxu0 %v117
    %146 = vmatprep.subr.bf16.mxu0 0
    %147 = vmatpush1.bf16.msra.mxu0 %v116
    %148 = vmatprep.subr.bf16.mxu0 0
    %149 = vmatpush2.bf16.msra.mxu0 0
    %150 = vmatprep.subr.bf16.mxu0 0
    %151 = vmatpush2.bf16.msra.mxu0 0
    %152 = vmatprep.subr.bf16.mxu0 0
    %153 = vmatpush2.bf16.msra.mxu0 0
    %154 = vmatprep.subr.bf16.mxu0 0
    %155 = vmatpush2.bf16.msra.mxu0 0
    %156 = vmatprep.subr.bf16.mxu0 0
    %157 = vmatpush2.bf16.msra.mxu0 0
    %158 = vmatprep.subr.bf16.mxu0 0
    %159 = vmatpush2.bf16.msra.mxu0 0
    %160 = vmatprep.subr.bf16.mxu0 0
    %161 = vmatpush2.bf16.msra.mxu0 0
    %162 = vmatprep.subr.bf16.mxu0 0
    %163 = vmatpush2.bf16.msra.mxu0 0
    %164 = vmatprep.mubr.bf16.mxu0 0
    %165 = vmatmul.mubr.bf16.gmra.mxu0 %v76
    %v166 = vpop.f32.mrf.mxu0
    %v167 = vadd.f32 %v58, %v166
    %v168 = vpop.f32.mrf.mxu0
    %v169 = vpop.f32.mrf.mxu0
    %v170 = vadd.f32 %v58, %v169
    %v171 = vpop.f32.mrf.mxu0
    %172 = vmatprep.mubr.bf16.mxu0 0
    %173 = vmatmul.mubr.bf16.gmra.mxu0 %v77
    %v174 = vpop.f32.mrf.mxu0
    %v175 = vadd.f32 %v58, %v174
    %v176 = vpop.f32.mrf.mxu0
    %v177 = vpop.f32.mrf.mxu0
    %v178 = vadd.f32 %v58, %v177
    %v179 = vpop.f32.mrf.mxu0
    %180 = vmatprep.mubr.bf16.mxu0 0
    %181 = vmatmul.mubr.bf16.gmra.mxu0 %v78
    %v182 = vpop.f32.mrf.mxu0
    %v183 = vadd.f32 %v58, %v182
    %v184 = vpop.f32.mrf.mxu0
    %v185 = vpop.f32.mrf.mxu0
    %v186 = vadd.f32 %v58, %v185
    %v187 = vpop.f32.mrf.mxu0
    %188 = vmatprep.mubr.bf16.mxu0 0
    %189 = vmatmul.mubr.bf16.gmra.mxu0 %v79
    %v190 = vpop.f32.mrf.mxu0
    %v191 = vadd.f32 %v58, %v190
    %v192 = vpop.f32.mrf.mxu0
    %v193 = vpop.f32.mrf.mxu0
    %v194 = vadd.f32 %v58, %v193
    %v195 = vpop.f32.mrf.mxu0
    %196 = vdwg.mxu0
    %v197 = vmax.f32 %v167, 0.0
    %v198 = vmax.f32 %v170, 0.0
    %v199 = vmax.f32 %v175, 0.0
    %v200 = vmax.f32 %v178, 0.0
    %v201 = vmax.f32 %v183, 0.0
    %v202 = vmax.f32 %v186, 0.0
    %v203 = vmax.f32 %v191, 0.0
    %v204 = vmax.f32 %v194, 0.0
    %v205 = vpack.c.bf16 %v198, %v197
    %v206 = vpack.c.bf16 %v200, %v199
    %v207 = vpack.c.bf16 %v202, %v201
    %v208 = vpack.c.bf16 %v204, %v203
    %s209 = scalar_lea.vmem [#allocation2], 64
    %v210 = vld [vmem:[%s209] sm:$0xf]
    %v211 = vld [vmem:[%s209 + $0x4] sm:$0xf]
    %v212 = vld [vmem:[%s209 + $0x8] sm:$0xf]
    %v213 = vld [vmem:[%s209 + $0xc] sm:$0xf]
    %v214 = vld [vmem:[%s209 + $0x10] sm:$0xf]
    %v215 = vld [vmem:[%s209 + $0x14] sm:$0xf]
    %v216 = vld [vmem:[%s209 + $0x18] sm:$0xf]
    %v217 = vld [vmem:[%s209 + $0x1c] sm:$0xf]
    %v218 = vld [vmem:[%s209 + $0x20] sm:$0xf]
    %v219 = vld [vmem:[%s209 + $0x24] sm:$0xf]
    %v220 = vld [vmem:[%s209 + $0x28] sm:$0xf]
    %v221 = vld [vmem:[%s209 + $0x2c] sm:$0xf]
    %v222 = vld [vmem:[%s209 + $0x30] sm:$0xf]
    %v223 = vld [vmem:[%s209 + $0x34] sm:$0xf]
    %v224 = vld [vmem:[%s209 + $0x38] sm:$0xf]
    %v225 = vld [vmem:[%s209 + $0x3c] sm:$0xf]
    %s226 = scalar_lea.vmem %s2, 1
    %v227 = vld [vmem:[%s226] sm:$0x1]
    %v229 = vlaneseq
    %v230 = vshrl.u32 %v229, 7
    %v231 = vsub.s32 0, %v230
    %v232 = vrot.slane %v227, %v231
    %v250 = vunpack.c.l.b16 %v210
    %v251 = vunpack.c.l.b16 %v211
    %v252 = vunpack.c.l.b16 %v212
    %v253 = vunpack.c.l.b16 %v213
    %v254 = vunpack.c.l.b16 %v214
    %v255 = vunpack.c.l.b16 %v215
    %v256 = vunpack.c.l.b16 %v216
    %v257 = vunpack.c.l.b16 %v217
    %v258 = vunpack.c.l.b16 %v218
    %v259 = vunpack.c.l.b16 %v219
    %v260 = vunpack.c.l.b16 %v220
    %v261 = vunpack.c.l.b16 %v221
    %v262 = vunpack.c.l.b16 %v222
    %v263 = vunpack.c.l.b16 %v223
    %v264 = vunpack.c.l.b16 %v224
    %v265 = vunpack.c.l.b16 %v225
    %v266 = vpack.c.b16 %v251, %v250
    %v267 = vpack.c.b16 %v253, %v252
    %v268 = vpack.c.b16 %v255, %v254
    %v269 = vpack.c.b16 %v257, %v256
    %v270 = vpack.c.b16 %v259, %v258
    %v271 = vpack.c.b16 %v261, %v260
    %v272 = vpack.c.b16 %v263, %v262
    %v273 = vpack.c.b16 %v265, %v264
    %282 = vmatprep.subr.bf16.mxu0 0
    %283 = vmatpush1.bf16.msra.mxu0 %v273
    %284 = vmatprep.subr.bf16.mxu0 0
    %285 = vmatpush1.bf16.msra.mxu0 %v272
    %286 = vmatprep.subr.bf16.mxu0 0
    %287 = vmatpush1.bf16.msra.mxu0 %v271
    %288 = vmatprep.subr.bf16.mxu0 0
    %289 = vmatpush1.bf16.msra.mxu0 %v270
    %290 = vmatprep.subr.bf16.mxu0 0
    %291 = vmatpush1.bf16.msra.mxu0 %v269
    %292 = vmatprep.subr.bf16.mxu0 0
    %293 = vmatpush1.bf16.msra.mxu0 %v268
    %294 = vmatprep.subr.bf16.mxu0 0
    %295 = vmatpush1.bf16.msra.mxu0 %v267
    %296 = vmatprep.subr.bf16.mxu0 0
    %297 = vmatpush1.bf16.msra.mxu0 %v266
    %298 = vmatprep.subr.bf16.mxu0 0
    %299 = vmatpush2.bf16.msra.mxu0 0
    %300 = vmatprep.subr.bf16.mxu0 0
    %301 = vmatpush2.bf16.msra.mxu0 0
    %302 = vmatprep.subr.bf16.mxu0 0
    %303 = vmatpush2.bf16.msra.mxu0 0
    %304 = vmatprep.subr.bf16.mxu0 0
    %305 = vmatpush2.bf16.msra.mxu0 0
    %306 = vmatprep.subr.bf16.mxu0 0
    %307 = vmatpush2.bf16.msra.mxu0 0
    %308 = vmatprep.subr.bf16.mxu0 0
    %309 = vmatpush2.bf16.msra.mxu0 0
    %310 = vmatprep.subr.bf16.mxu0 0
    %311 = vmatpush2.bf16.msra.mxu0 0
    %312 = vmatprep.subr.bf16.mxu0 0
    %313 = vmatpush2.bf16.msra.mxu0 0
    %314 = vmatprep.mubr.bf16.mxu0 0
    %315 = vmatmul.mubr.bf16.gmra.mxu0 %v205
    %v316 = vpop.f32.mrf.mxu0
    %v317 = vadd.f32 %v232, %v316
    %v318 = vpop.f32.mrf.mxu0
    %v319 = vpop.f32.mrf.mxu0
    %v320 = vadd.f32 %v232, %v319
    %v321 = vpop.f32.mrf.mxu0
    %322 = vmatprep.mubr.bf16.mxu0 0
    %323 = vmatmul.mubr.bf16.gmra.mxu0 %v206
    %v324 = vpop.f32.mrf.mxu0
    %v325 = vadd.f32 %v232, %v324
    %v326 = vpop.f32.mrf.mxu0
    %v327 = vpop.f32.mrf.mxu0
    %v328 = vadd.f32 %v232, %v327
    %v329 = vpop.f32.mrf.mxu0
    %330 = vmatprep.mubr.bf16.mxu0 0
    %331 = vmatmul.mubr.bf16.gmra.mxu0 %v207
    %v332 = vpop.f32.mrf.mxu0
    %v333 = vadd.f32 %v232, %v332
    %v334 = vpop.f32.mrf.mxu0
    %v335 = vpop.f32.mrf.mxu0
    %v336 = vadd.f32 %v232, %v335
    %v337 = vpop.f32.mrf.mxu0
    %338 = vmatprep.mubr.bf16.mxu0 0
    %339 = vmatmul.mubr.bf16.gmra.mxu0 %v208
    %v340 = vpop.f32.mrf.mxu0
    %v341 = vadd.f32 %v232, %v340
    %v342 = vpop.f32.mrf.mxu0
    %v343 = vpop.f32.mrf.mxu0
    %v344 = vadd.f32 %v232, %v343
    %v345 = vpop.f32.mrf.mxu0
    %346 = vdwg.mxu0
    %v347 = vmax.f32 %v317, 0.0
    %v348 = vmax.f32 %v320, 0.0
    %v349 = vmax.f32 %v325, 0.0
    %v350 = vmax.f32 %v328, 0.0
    %v351 = vmax.f32 %v333, 0.0
    %v352 = vmax.f32 %v336, 0.0
    %v353 = vmax.f32 %v341, 0.0
    %v354 = vmax.f32 %v344, 0.0
    %v355 = vpack.c.bf16 %v348, %v347
    %v356 = vpack.c.bf16 %v350, %v349
    %v357 = vpack.c.bf16 %v352, %v351
    %v358 = vpack.c.bf16 %v354, %v353
    %s359 = scalar_lea.vmem [#allocation2], 128
    %v360 = vld [vmem:[%s359] sm:$0xf]
    %v361 = vld [vmem:[%s359 + $0x4] sm:$0xf]
    %v362 = vld [vmem:[%s359 + $0x8] sm:$0xf]
    %v363 = vld [vmem:[%s359 + $0xc] sm:$0xf]
    %v364 = vld [vmem:[%s359 + $0x10] sm:$0xf]
    %v365 = vld [vmem:[%s359 + $0x14] sm:$0xf]
    %v366 = vld [vmem:[%s359 + $0x18] sm:$0xf]
    %v367 = vld [vmem:[%s359 + $0x1c] sm:$0xf]
    %v368 = vld [vmem:[%s359 + $0x20] sm:$0xf]
    %v369 = vld [vmem:[%s359 + $0x24] sm:$0xf]
    %v370 = vld [vmem:[%s359 + $0x28] sm:$0xf]
    %v371 = vld [vmem:[%s359 + $0x2c] sm:$0xf]
    %v372 = vld [vmem:[%s359 + $0x30] sm:$0xf]
    %v373 = vld [vmem:[%s359 + $0x34] sm:$0xf]
    %v374 = vld [vmem:[%s359 + $0x38] sm:$0xf]
    %v375 = vld [vmem:[%s359 + $0x3c] sm:$0xf]
    %s376 = scalar_lea.vmem %s2, 2
    %v377 = vld [vmem:[%s376] sm:$0x1]
    %v379 = vlaneseq
    %v380 = vshrl.u32 %v379, 7
    %v381 = vsub.s32 0, %v380
    %v382 = vrot.slane %v377, %v381
    %v400 = vunpack.c.l.b16 %v360
    %v401 = vunpack.c.l.b16 %v361
    %v402 = vunpack.c.l.b16 %v362
    %v403 = vunpack.c.l.b16 %v363
    %v404 = vunpack.c.l.b16 %v364
    %v405 = vunpack.c.l.b16 %v365
    %v406 = vunpack.c.l.b16 %v366
    %v407 = vunpack.c.l.b16 %v367
    %v408 = vunpack.c.l.b16 %v368
    %v409 = vunpack.c.l.b16 %v369
    %v410 = vunpack.c.l.b16 %v370
    %v411 = vunpack.c.l.b16 %v371
    %v412 = vunpack.c.l.b16 %v372
    %v413 = vunpack.c.l.b16 %v373
    %v414 = vunpack.c.l.b16 %v374
    %v415 = vunpack.c.l.b16 %v375
    %v416 = vpack.c.b16 %v401, %v400
    %v417 = vpack.c.b16 %v403, %v402
    %v418 = vpack.c.b16 %v405, %v404
    %v419 = vpack.c.b16 %v407, %v406
    %v420 = vpack.c.b16 %v409, %v408
    %v421 = vpack.c.b16 %v411, %v410
    %v422 = vpack.c.b16 %v413, %v412
    %v423 = vpack.c.b16 %v415, %v414
    %432 = vmatprep.subr.bf16.mxu0 0
    %433 = vmatpush1.bf16.msra.mxu0 %v423
    %434 = vmatprep.subr.bf16.mxu0 0
    %435 = vmatpush1.bf16.msra.mxu0 %v422
    %436 = vmatprep.subr.bf16.mxu0 0
    %437 = vmatpush1.bf16.msra.mxu0 %v421
    %438 = vmatprep.subr.bf16.mxu0 0
    %439 = vmatpush1.bf16.msra.mxu0 %v420
    %440 = vmatprep.subr.bf16.mxu0 0
    %441 = vmatpush1.bf16.msra.mxu0 %v419
    %442 = vmatprep.subr.bf16.mxu0 0
    %443 = vmatpush1.bf16.msra.mxu0 %v418
    %444 = vmatprep.subr.bf16.mxu0 0
    %445 = vmatpush1.bf16.msra.mxu0 %v417
    %446 = vmatprep.subr.bf16.mxu0 0
    %447 = vmatpush1.bf16.msra.mxu0 %v416
    %448 = vmatprep.subr.bf16.mxu0 0
    %449 = vmatpush2.bf16.msra.mxu0 0
    %450 = vmatprep.subr.bf16.mxu0 0
    %451 = vmatpush2.bf16.msra.mxu0 0
    %452 = vmatprep.subr.bf16.mxu0 0
    %453 = vmatpush2.bf16.msra.mxu0 0
    %454 = vmatprep.subr.bf16.mxu0 0
    %455 = vmatpush2.bf16.msra.mxu0 0
    %456 = vmatprep.subr.bf16.mxu0 0
    %457 = vmatpush2.bf16.msra.mxu0 0
    %458 = vmatprep.subr.bf16.mxu0 0
    %459 = vmatpush2.bf16.msra.mxu0 0
    %460 = vmatprep.subr.bf16.mxu0 0
    %461 = vmatpush2.bf16.msra.mxu0 0
    %462 = vmatprep.subr.bf16.mxu0 0
    %463 = vmatpush2.bf16.msra.mxu0 0
    %464 = vmatprep.mubr.bf16.mxu0 0
    %465 = vmatmul.mubr.bf16.gmra.mxu0 %v355
    %v466 = vpop.f32.mrf.mxu0
    %v467 = vadd.f32 %v382, %v466
    %v468 = vpop.f32.mrf.mxu0
    %v469 = vpop.f32.mrf.mxu0
    %v470 = vadd.f32 %v382, %v469
    %v471 = vpop.f32.mrf.mxu0
    %472 = vmatprep.mubr.bf16.mxu0 0
    %473 = vmatmul.mubr.bf16.gmra.mxu0 %v356
    %v474 = vpop.f32.mrf.mxu0
    %v475 = vadd.f32 %v382, %v474
    %v476 = vpop.f32.mrf.mxu0
    %v477 = vpop.f32.mrf.mxu0
    %v478 = vadd.f32 %v382, %v477
    %v479 = vpop.f32.mrf.mxu0
    %480 = vmatprep.mubr.bf16.mxu0 0
    %481 = vmatmul.mubr.bf16.gmra.mxu0 %v357
    %v482 = vpop.f32.mrf.mxu0
    %v483 = vadd.f32 %v382, %v482
    %v484 = vpop.f32.mrf.mxu0
    %v485 = vpop.f32.mrf.mxu0
    %v486 = vadd.f32 %v382, %v485
    %v487 = vpop.f32.mrf.mxu0
    %488 = vmatprep.mubr.bf16.mxu0 0
    %489 = vmatmul.mubr.bf16.gmra.mxu0 %v358
    %v490 = vpop.f32.mrf.mxu0
    %v491 = vadd.f32 %v382, %v490
    %v492 = vpop.f32.mrf.mxu0
    %v493 = vpop.f32.mrf.mxu0
    %v494 = vadd.f32 %v382, %v493
    %v495 = vpop.f32.mrf.mxu0
    %496 = vdwg.mxu0
    %497 = vst [vmem:[%s3] sm:$0xff] %v467
    %498 = vst [vmem:[%s3 + $0x8] sm:$0xff] %v470
    %499 = vst [vmem:[%s3 + $0x10] sm:$0xff] %v475
    %500 = vst [vmem:[%s3 + $0x18] sm:$0xff] %v478
    %501 = vst [vmem:[%s3 + $0x20] sm:$0xff] %v483
    %502 = vst [vmem:[%s3 + $0x28] sm:$0xff] %v486
    %503 = vst [vmem:[%s3 + $0x30] sm:$0xff] %v491
    %504 = vst [vmem:[%s3 + $0x38] sm:$0xff] %v494
    // Predicated region
    $region18: #{mlp_forward.1} parent=1 // pred_check
      _
    $region19: #{mlp_forward.1} parent=1 // pred_check_branch
      %506 = sbr.rel (0) target = $region21
    $region20: #{mlp_forward.1} parent=1 // pred_region
      _
    $region21: #{mlp_forward.1} parent=1 // pred_fallthru
      _
    // Predicated region
    $region22: #{mlp_forward.1} parent=1 // pred_check
      _
    $region23: #{mlp_forward.1} parent=1 // pred_check_branch
      %508 = sbr.rel (0) target = $region25
    $region24: #{mlp_forward.1} parent=1 // pred_region
      _
    $region25: #{mlp_forward.1} parent=1 // pred_fallthru
      _
    %509 = vsyncpa [#allocation3], 1

</llo_original>
